<compile_context>
chip_gen: v7x
topology: tpu7x:2x2x1
jax: 0.10.0
libtpu: 0.0.40
codegen_flags: <defaults>
</compile_context>

<pallas_src>
import jax
import jax.numpy as jnp
from jax.experimental import pallas as pl
from jax.experimental.pallas import tpu as pltpu


def _round_up(x: int, m: int) -> int:
    return (x + m - 1) // m * m


def _patch_embed_kernel(x_ref, w_ref, o_ref):
    # Cast the activation tile to the weight dtype on the VPU (hidden under the
    # MXU) instead of a separate HBM-level astype pass in the wrapper.
    x = x_ref[...].astype(w_ref.dtype)
    o_ref[...] = jnp.dot(
        x, w_ref[...], preferred_element_type=jnp.float32
    ).astype(o_ref.dtype)


def qwen2_5_vision_patch_embed(
    hidden_states: jax.Array,
    proj_weight: jax.Array,
    *,
    patch_size: int,
    temporal_patch_size: int,
    in_channels: int,
    embed_dim: int,
    tile_m: int = 512,
    vmem_budget_bytes: int = 40 * 1024 * 1024,
) -> jax.Array:
    """hidden_states: (..., C*T*P*P) with arbitrary leading dims (like torch .view(-1, ...)).
    proj_weight: (embed_dim, C, T, P, P) — Conv3d weight, bias=False.
    Returns: (num_patches, embed_dim) in the weight dtype (matches the module)."""
    k = in_channels * temporal_patch_size * patch_size * patch_size
    target_dtype = proj_weight.dtype

    # Flatten to (N, K) with K ordered (c, t, h, w) — identical to flattening the
    # torch NCTHW view.  No astype here: the cast happens inside the kernel.
    x = hidden_states.reshape(-1, k)
    # (K, E) weight.  One-time, tiny vs. the activation traffic; constant-folded
    # when the weight is a jit constant.  Doing the transpose here (rather than a
    # transposed-RHS dot in the kernel) avoids per-grid-step transpose work.
    w = proj_weight.reshape(embed_dim, k).T

    n = x.shape[0]

    # ---- VMEM budget: pick the largest M tile whose pipeline buffers fit. ----
    k_pad = _round_up(k, 128)           # lane padding the compiler will apply
    e_pad = _round_up(embed_dim, 128)
    x_bytes = x.dtype.itemsize
    o_bytes = jnp.dtype(target_dtype).itemsize
    w_bytes = jnp.dtype(target_dtype).itemsize

    def vmem_bytes(tm: int) -> int:
        x_bufs = 2 * tm * k_pad * x_bytes          # double-buffered X tile
        o_bufs = 2 * tm * e_pad * o_bytes          # double-buffered out tile
        w_bufs = 2 * k_pad * e_pad * w_bytes       # resident weight (2 bufs allocated)
        return x_bufs + o_bufs + w_bufs

    # Keep the tile a multiple of 8 sublanes and never (much) larger than N.
    tile_m = max(8, min(tile_m, _round_up(n, 8)))
    tile_m = _round_up(tile_m, 8)
    while tile_m > 256 and vmem_bytes(tile_m) > vmem_budget_bytes:
        tile_m //= 2
    vmem_limit = min(
        max(int(vmem_bytes(tile_m) * 1.25) + (2 << 20), 32 * 1024 * 1024),
        56 * 1024 * 1024,  # stay well under v7x's 64 MiB physical VMEM
    )

    grid = (pl.cdiv(n, tile_m),)  # ragged last block handled by masked stores

    out = pl.pallas_call(
        _patch_embed_kernel,
        out_shape=jax.ShapeDtypeStruct((n, embed_dim), target_dtype),
        grid_spec=pltpu.PrefetchScalarGridSpec(
            num_scalar_prefetch=0,
            grid=grid,
            in_specs=[
                pl.BlockSpec((tile_m, k), lambda i: (i, 0)),      # X tile
                pl.BlockSpec((k, embed_dim), lambda i: (0, 0)),   # full W, constant index
            ],
            out_specs=pl.BlockSpec((tile_m, embed_dim), lambda i: (i, 0)),
        ),
        compiler_params=pltpu.CompilerParams(
            dimension_semantics=("parallel",),   # megacore-shardable M axis
            vmem_limit_bytes=vmem_limit,
        ),
    )(x, w)
    return out


if __name__ == "__main__":
    # Small, module-consistent sizes (module defaults except a small patch_size).
    patch_size = 4
    temporal_patch_size = 2
    in_channels = 3
    embed_dim = 128
    num_patches = 300  # deliberately NOT a multiple of the tile -> ragged tail
    k = in_channels * temporal_patch_size * patch_size * patch_size  # 96

    key = jax.random.PRNGKey(0)
    kx, kw = jax.random.split(key)
    x = jax.random.normal(kx, (num_patches, k), dtype=jnp.float32)
    proj_weight = jax.random.normal(
        kw,
        (embed_dim, in_channels, temporal_patch_size, patch_size, patch_size),
        dtype=jnp.float32,
    ) * (1.0 / jnp.sqrt(k))

    # --- f32 weight, small explicit tile so the grid has several steps + ragged tail.
    out = qwen2_5_vision_patch_embed(
        x,
        proj_weight,
        patch_size=patch_size,
        temporal_patch_size=temporal_patch_size,
        in_channels=in_channels,
        embed_dim=embed_dim,
        tile_m=128,
    )
    out = jax.block_until_ready(out)
    ref = x @ proj_weight.reshape(embed_dim, k).T
    assert out.shape == (num_patches, embed_dim)
    assert jnp.allclose(out, ref, atol=1e-4, rtol=1e-4)

    # --- bf16 weight (deployment dtype): kernel casts X on-chip, like torch's
    #     hidden_states.to(dtype=weight.dtype); reference does the same.
    w_bf16 = proj_weight.astype(jnp.bfloat16)
    out_bf16 = qwen2_5_vision_patch_embed(
        x,
        w_bf16,
        patch_size=patch_size,
        temporal_patch_size=temporal_patch_size,
        in_channels=in_channels,
        embed_dim=embed_dim,
    )
    out_bf16 = jax.block_until_ready(out_bf16)
    ref_bf16 = jnp.dot(
        x.astype(jnp.bfloat16),
        w_bf16.reshape(embed_dim, k).T,
        preferred_element_type=jnp.float32,
    ).astype(jnp.bfloat16)
    assert out_bf16.shape == (num_patches, embed_dim)
    assert out_bf16.dtype == jnp.bfloat16
    assert jnp.allclose(
        out_bf16.astype(jnp.float32),
        ref_bf16.astype(jnp.float32),
        atol=5e-2,
        rtol=5e-2,
    )

    print("KERNEL_OK")
</pallas_src>

<mosaic_0001>
module attributes {stable_mosaic.version = 11 : i64} {
  func.func @_patch_embed_kernel(%arg0: i32, %arg1: memref<128x96xf32, #tpu.memory_space<vmem>>, %arg2: memref<96x128xf32, #tpu.memory_space<vmem>>, %arg3: memref<128x128xf32, #tpu.memory_space<vmem>>) attributes {dimension_semantics = [#tpu.dimension_semantics<parallel>], iteration_bounds = array<i64: 3>, scalar_prefetch = 0 : i64, scratch_operands = 0 : i64, tpu.core_type = #tpu.core_type<tc>, window_params = [{transform_indices = @transform_0, window_bounds = array<i64: 128, 96>}, {pipeline_mode = #tpu.pipeline_mode<synchronous>, transform_indices = @transform_1, window_bounds = array<i64: 96, 128>}, {transform_indices = @transform_2, window_bounds = array<i64: 128, 128>}]} {
    %c0 = arith.constant 0 : index
    %c0_0 = arith.constant 0 : index
    %0 = vector.load %arg1[%c0, %c0_0] : memref<128x96xf32, #tpu.memory_space<vmem>>, vector<128x96xf32>
    %c0_1 = arith.constant 0 : index
    %c0_2 = arith.constant 0 : index
    %1 = vector.load %arg2[%c0_1, %c0_2] : memref<96x128xf32, #tpu.memory_space<vmem>>, vector<96x128xf32>
    %cst = arith.constant dense<0.000000e+00> : vector<128x128xf32>
    %2 = tpu.matmul %0, %1, %cst {dimension_numbers = #tpu.dot_dimension_numbers<[1], [0], [0], [1], [0, 0, 1, 1], [], []>} : vector<128x96xf32>, vector<96x128xf32>, vector<128x128xf32> -> vector<128x128xf32>
    %c0_3 = arith.constant 0 : index
    %c0_4 = arith.constant 0 : index
    %3 = vector.load %arg3[%c0_3, %c0_4] : memref<128x128xf32, #tpu.memory_space<vmem>>, vector<128x128xf32>
    tpu.vector_store %arg3[%c0_3, %c0_4], %2 {strides = array<i32>} : memref<128x128xf32, #tpu.memory_space<vmem>>, vector<128x128xf32>,
    return
  }
  func.func @transform_0(%arg0: i32) -> (i32, i32) {
    %c0_i32 = arith.constant 0 : i32
    %c0_i32_0 = arith.constant 0 : i32
    return %arg0, %c0_i32 : i32, i32
  }
  func.func @transform_1(%arg0: i32) -> (i32, i32) {
    %c0_i32 = arith.constant 0 : i32
    %c0_i32_0 = arith.constant 0 : i32
    %c0_i32_1 = arith.constant 0 : i32
    return %c0_i32, %c0_i32_0 : i32, i32
  }
  func.func @transform_2(%arg0: i32) -> (i32, i32) {
    %c0_i32 = arith.constant 0 : i32
    %c0_i32_0 = arith.constant 0 : i32
    return %arg0, %c0_i32 : i32, i32
  }
}

</mosaic_0001>

<llo_original>
// kernel: tpu_custom_call.1
$region0: #{tpu_custom_call.1}
  #allocation0 [shape = 'u32[]', space=smem, size = 0x4, offset = 0x4, fixed_abs, tag = 'smem constant byte address 0x4 - core index']
  #allocation1 [shape = 'u32[144,128]{1,0:T(1,128)}', space=vmem, size = 0x12000, scoped, tag = 'internal scratch']
  %s0 = inlined_call_operand.vmem [shape: f32[300,96], index: 0, kind: input, shape index: {}]
  %s1 = inlined_call_operand.vmem [shape: f32[96,128], index: 1, kind: input, shape index: {}]
  %s2 = inlined_call_operand.hbm [shape: f32[300,128], index: 2, kind: output, shape index: {}]
  %s3 = sld [smem:[#allocation0]]
  $region41: #{tpu_custom_call.1} parent=0
    _
  %s5 = ssub.s32 1, %s3
  %s6 = scalar_select 0, %s5, %s3
  $region1: #{tpu_custom_call.1} parent=0
    #allocation2 [shape = 'u8[131072]{0}', space=vmem, size = 0x20000, scoped, tag = 'output window, operand 0']
    #allocation3 [shape = 's32[2]{0}', space=sflag, size = 0x8, scoped, tag = 'scoped memory for tpu_custom_call.1']
    %7 = vsyncpa [#allocation3], 0
    %s8 = scalar_lea.sflag [#allocation3], 1
    %9 = vsyncpa %s8, 0
    loop: start=0, step=1, limit=5
    $region2: #{tpu_custom_call.1} parent=1 // loop_pre_header
      _
    $region3: #{tpu_custom_call.1} parent=1 // loop_header
      %s11 = sphi 0, %s15
      %p12 = scmp.ge.s32.totalorder %s11, 5
      %s21 = sphi 0, %s23
      %s24 = sphi 0, %s21
      %s25 = sphi 0, %s24
      %s41 = sphi 0, %s25
      %s45 = sphi 0, %s45
      %s47 = sphi 0, %s45
      %s48 = sphi 0, %s47
      %s62 = sphi 0, %s48
      %s68 = sphi 0, %s70
      %s71 = sphi 0, %s68
      %s72 = sphi 0, %s71
      %s88 = sphi 0, %s72
    $region4: #{tpu_custom_call.1} parent=1 // loop_header_branch
      %14 = sbr.rel (%p12) target = $region8
    $region5: #{tpu_custom_call.1} parent=1 // loop_body
      %s16 = ssub.s32 %s11, 1
      %s17 = ssub.s32 %s11, 2
      %s18 = sadd.s32 %s11, 1
      %s19 = ssub.s32 %s11, %s18
      %p20 = scmp.eq.s32.totalorder %s19, 0
      %s22 = sadd.s32 %s21, 1
      %s23 = scalar_select %p20, %s21, %s22
      %p26 = pneg %p20
      %p27 = scmp.eq.s32.totalorder %s11, 2
      %p28 = por %p26, %p27
      %p29 = scmp.ne.s32.totalorder %s21, %s24
      %p30 = scmp.eq.s32.totalorder %s11, 0
      %p31 = por %p29, %p30
      %p32 = scmp.ne.s32.totalorder %s21, %s24
      %p33 = scmp.eq.s32.totalorder %s16, 2
      %p34 = por %p32, %p33
      %p35 = scmp.ne.s32.totalorder %s24, %s25
      %p36 = scmp.eq.s32.totalorder %s16, 0
      %p37 = por %p35, %p36
      %p38 = scmp.ne.s32.totalorder %s24, %s25
      %p39 = scmp.eq.s32.totalorder %s17, 2
      %p40 = por %p38, %p39
      %p42 = scmp.ne.s32.totalorder %s25, %s41
      %p43 = scmp.eq.s32.totalorder %s17, 0
      %p44 = por %p42, %p43
      %s46 = sadd.s32 %s45, 1
      %p49 = scmp.eq.s32.totalorder %s11, 2
      %p50 = scmp.ne.s32.totalorder %s45, %s47
      %p51 = scmp.eq.s32.totalorder %s11, 0
      %p52 = por %p50, %p51
      %p53 = scmp.ne.s32.totalorder %s45, %s47
      %p54 = scmp.eq.s32.totalorder %s16, 2
      %p55 = por %p53, %p54
      %p56 = scmp.ne.s32.totalorder %s47, %s48
      %p57 = scmp.eq.s32.totalorder %s16, 0
      %p58 = por %p56, %p57
      %p59 = scmp.ne.s32.totalorder %s47, %s48
      %p60 = scmp.eq.s32.totalorder %s17, 2
      %p61 = por %p59, %p60
      %p63 = scmp.ne.s32.totalorder %s48, %s62
      %p64 = scmp.eq.s32.totalorder %s17, 0
      %p65 = por %p63, %p64
      %s66 = ssub.s32 %s11, %s18
      %p67 = scmp.eq.s32.totalorder %s66, 0
      %s69 = sadd.s32 %s68, 1
      %s70 = scalar_select %p67, %s68, %s69
      %p73 = pneg %p67
      %p74 = scmp.eq.s32.totalorder %s11, 2
      %p75 = por %p73, %p74
      %p76 = scmp.ne.s32.totalorder %s68, %s71
      %p77 = scmp.eq.s32.totalorder %s11, 0
      %p78 = por %p76, %p77
      %p79 = scmp.ne.s32.totalorder %s68, %s71
      %p80 = scmp.eq.s32.totalorder %s16, 2
      %p81 = por %p79, %p80
      %p82 = scmp.ne.s32.totalorder %s71, %s72
      %p83 = scmp.eq.s32.totalorder %s16, 0
      %p84 = por %p82, %p83
      %p85 = scmp.ne.s32.totalorder %s71, %s72
      %p86 = scmp.eq.s32.totalorder %s17, 2
      %p87 = por %p85, %p86
      %p89 = scmp.ne.s32.totalorder %s72, %s88
      %p90 = scmp.eq.s32.totalorder %s17, 0
      %p91 = por %p89, %p90
      %p92 = scmp.le.s32.totalorder 1, %s11
      %p93 = scmp.lt.s32.totalorder %s11, 4
      %p94 = pnand %p92, %p93
      %p95 = pneg %p94
      // Predicated region
      $region9: #{tpu_custom_call.1} parent=5 // pred_check
        _
      $region10: #{tpu_custom_call.1} parent=5 // pred_check_branch
        %97 = sbr.rel (%p94) target = $region12
      $region11: #{tpu_custom_call.1} parent=5 // pred_region
        %s98 = ssub.s32 %s11, 1
        // Predicated region
        $region13: #{tpu_custom_call.1} parent=11 // pred_check
          %p99 = pneg %p58
        $region14: #{tpu_custom_call.1} parent=11 // pred_check_branch
          %101 = sbr.rel (%p99) target = $region16
        $region15: #{tpu_custom_call.1} parent=11 // pred_region
          _
        $region16: #{tpu_custom_call.1} parent=11 // pred_fallthru
          _
      $region12: #{tpu_custom_call.1} parent=5 // pred_fallthru
        _
      %p102 = scmp.lt.s32.totalorder %s11, 3
      // Predicated region
      $region17: #{tpu_custom_call.1} parent=5 // pred_check
        %p103 = pneg %p102
      $region18: #{tpu_custom_call.1} parent=5 // pred_check_branch
        %105 = sbr.rel (%p103) target = $region20
      $region19: #{tpu_custom_call.1} parent=5 // pred_region
        // Predicated region
        $region21: #{tpu_custom_call.1} parent=19 // pred_check
          %p106 = pneg %p31
        $region22: #{tpu_custom_call.1} parent=19 // pred_check_branch
          %108 = sbr.rel (%p106) target = $region24
        $region23: #{tpu_custom_call.1} parent=19 // pred_region
          %s109 = smul.u32 16, %s11
          %s110 = ssub.s32 38, %s109
          %p111 = scmp.lt.s32.totalorder %s110, 16
          %s112 = scalar_select %p111, %s110, 16
          %s113 = smul.u32 128, %s112
          %p114 = scmp.lt.s32.totalorder %s109, 37
          %s115 = scalar_select %p114, %s109, 37
          %s116 = smul.addr %s115, 8
          %s117 = scalar_lea.vmem %s0, %s116
          %s118 = smul.u32 16, %s11
          %s119 = ssub.s32 38, %s118
          %p120 = scmp.lt.s32.totalorder %s119, 16
          %s121 = scalar_select %p120, %s119, 16
          %s122 = smul.u32 128, %s121
        $region24: #{tpu_custom_call.1} parent=19 // pred_fallthru
          _
      $region20: #{tpu_custom_call.1} parent=5 // pred_fallthru
        _
      %p123 = scmp.le.s32.totalorder 1, %s11
      %p124 = scmp.lt.s32.totalorder %s11, 4
      %p125 = pnand %p123, %p124
      %p126 = pneg %p125
      // Predicated region
      $region25: #{tpu_custom_call.1} parent=5 // pred_check
        _
      $region26: #{tpu_custom_call.1} parent=5 // pred_check_branch
        %128 = sbr.rel (%p125) target = $region28
      $region27: #{tpu_custom_call.1} parent=5 // pred_region
        %s129 = ssub.s32 %s11, 1
        %s130 = smul.u32 16, %s16
        %s131 = ssub.s32 38, %s130
        %p132 = scmp.lt.s32.totalorder %s131, 16
        %s133 = scalar_select %p132, %s131, 16
        %s134 = smul.u32 128, %s133
        %p135 = scmp.lt.s32.totalorder %s130, 37
        %s136 = scalar_select %p135, %s130, 37
        %s137 = smul.addr %s136, 8
        %s138 = scalar_lea.vmem %s0, %s137
        %p139 = pneg %p37
        %p140 = pneg %p34
        %p141 = pneg %p58
        %p142 = pneg %p55
        %p143 = pneg %p84
        %p144 = pneg %p81
        %s145 = sand.u32 %s71, 1
        %s146 = scalar_lea.sflag [#allocation3], %s145
        %s147 = sand.u32 %s71, 1
        %s148 = smul.addr %s147, 128
        %s149 = scalar_lea.vmem [#allocation2], %s148
        %s150 = smul.u32 16, %s16
        %s151 = ssub.s32 38, %s150
        %p152 = scmp.lt.s32.totalorder %s151, 16
        %s153 = scalar_select %p152, %s151, 16
        %s154 = smul.u32 128, %s153
        %p155 = scmp.lt.s32.totalorder %s150, 37
        %s156 = scalar_select %p155, %s150, 37
        %s157 = smul.addr %s156, 8
        %s158 = scalar_lea.vmem %s0, %s157
        %s159 = smul.u32 16, %s16
        %s160 = ssub.s32 38, %s159
        %p161 = scmp.lt.s32.totalorder %s160, 16
        %s162 = scalar_select %p161, %s160, 16
        %s163 = smul.u32 128, %s162
        %s164 = smul.u32 16, %s16
        %s165 = ssub.s32 38, %s164
        %p166 = scmp.lt.s32.totalorder %s165, 16
        %s167 = scalar_select %p166, %s165, 16
        %s168 = smul.u32 128, %s167
        %v169 = vld [vmem:[%s158] sm:$0xff]
        %v170 = vld [vmem:[%s158 + $0x8] sm:$0xff]
        %v171 = vld [vmem:[%s158 + $0x10] sm:$0xff]
        %v172 = vld [vmem:[%s158 + $0x18] sm:$0xff]
        %v173 = vld [vmem:[%s158 + $0x20] sm:$0xff]
        %v174 = vld [vmem:[%s158 + $0x28] sm:$0xff]
        %v175 = vld [vmem:[%s158 + $0x30] sm:$0xff]
        %v176 = vld [vmem:[%s158 + $0x38] sm:$0xff]
        %v177 = vld [vmem:[%s158 + $0x40] sm:$0xff]
        %v178 = vld [vmem:[%s158 + $0x48] sm:$0xff]
        %v179 = vld [vmem:[%s158 + $0x50] sm:$0xff]
        %v180 = vld [vmem:[%s158 + $0x58] sm:$0xff]
        %v181 = vld [vmem:[%s158 + $0x60] sm:$0xff]
        %v182 = vld [vmem:[%s158 + $0x68] sm:$0xff]
        %v183 = vld [vmem:[%s158 + $0x70] sm:$0xff]
        %v184 = vld [vmem:[%s158 + $0x78] sm:$0xff]
        %v185 = vld [vmem:[%s1] sm:$0xff]
        %v186 = vld [vmem:[%s1 + $0x8] sm:$0xff]
        %v187 = vld [vmem:[%s1 + $0x10] sm:$0xff]
        %v188 = vld [vmem:[%s1 + $0x18] sm:$0xff]
        %v189 = vld [vmem:[%s1 + $0x20] sm:$0xff]
        %v190 = vld [vmem:[%s1 + $0x28] sm:$0xff]
        %v191 = vld [vmem:[%s1 + $0x30] sm:$0xff]
        %v192 = vld [vmem:[%s1 + $0x38] sm:$0xff]
        %v193 = vld [vmem:[%s1 + $0x40] sm:$0xff]
        %v194 = vld [vmem:[%s1 + $0x48] sm:$0xff]
        %v195 = vld [vmem:[%s1 + $0x50] sm:$0xff]
        %v196 = vld [vmem:[%s1 + $0x58] sm:$0xff]
        %vm197 = vcmask 785408
        %v199 = vsel %vm197, %v169, 0
        %v202 = vsel %vm197, %v170, 0
        %v205 = vsel %vm197, %v171, 0
        %v208 = vsel %vm197, %v172, 0
        %v211 = vsel %vm197, %v173, 0
        %v214 = vsel %vm197, %v174, 0
        %v217 = vsel %vm197, %v175, 0
        %v220 = vsel %vm197, %v176, 0
        %v223 = vsel %vm197, %v177, 0
        %v226 = vsel %vm197, %v178, 0
        %v229 = vsel %vm197, %v179, 0
        %v232 = vsel %vm197, %v180, 0
        %v235 = vsel %vm197, %v181, 0
        %v238 = vsel %vm197, %v182, 0
        %v241 = vsel %vm197, %v183, 0
        %v244 = vsel %vm197, %v184, 0
        %246 = vmatprep.subr.mxu0 0.0
        %247 = vmatpush1.msra.mxu0 %v185
        %248 = vmatprep.subr.mxu0 0.0
        %249 = vmatpush1.msra.mxu0 %v186
        %250 = vmatprep.subr.mxu0 0.0
        %251 = vmatpush1.msra.mxu0 %v187
        %252 = vmatprep.subr.mxu0 0.0
        %253 = vmatpush1.msra.mxu0 %v188
        %254 = vmatprep.subr.mxu0 0.0
        %255 = vmatpush1.msra.mxu0 %v189
        %256 = vmatprep.subr.mxu0 0.0
        %257 = vmatpush1.msra.mxu0 %v190
        %258 = vmatprep.subr.mxu0 0.0
        %259 = vmatpush1.msra.mxu0 %v191
        %260 = vmatprep.subr.mxu0 0.0
        %261 = vmatpush1.msra.mxu0 %v192
        %262 = vmatprep.subr.mxu0 0.0
        %263 = vmatpush1.msra.mxu0 %v193
        %264 = vmatprep.subr.mxu0 0.0
        %265 = vmatpush1.msra.mxu0 %v194
        %266 = vmatprep.subr.mxu0 0.0
        %267 = vmatpush1.msra.mxu0 %v195
        %268 = vmatprep.subr.mxu0 0.0
        %269 = vmatpush1.msra.mxu0 %v196
        %270 = vmatprep.subr.mxu0 0.0
        %271 = vmatpush1.msra.mxu0 0.0
        %272 = vmatprep.subr.mxu0 0.0
        %273 = vmatpush1.msra.mxu0 0.0
        %274 = vmatprep.subr.mxu0 0.0
        %275 = vmatpush1.msra.mxu0 0.0
        %276 = vmatprep.subr.mxu0 0.0
        %277 = vmatpush1.msra.mxu0 0.0
        %278 = vmatprep.subr.mxu0 0.0
        %279 = vmatpush1.msra.mxu0 0.0
        %280 = vmatprep.subr.mxu0 0.0
        %281 = vmatpush1.msra.mxu0 0.0
        %282 = vmatprep.subr.mxu0 0.0
        %283 = vmatpush1.msra.mxu0 0.0
        %284 = vmatprep.subr.mxu0 0.0
        %285 = vmatpush1.msra.mxu0 0.0
        %286 = vmatprep.subr.mxu0 0.0
        %287 = vmatpush1.msra.mxu0 0.0
        %288 = vmatprep.subr.mxu0 0.0
        %289 = vmatpush1.msra.mxu0 0.0
        %290 = vmatprep.subr.mxu0 0.0
        %291 = vmatpush1.msra.mxu0 0.0
        %292 = vmatprep.subr.mxu0 0.0
        %293 = vmatpush1.msra.mxu0 0.0
        %294 = vmatprep.subr.mxu0 0.0
        %295 = vmatpush1.msra.mxu0 0.0
        %296 = vmatprep.subr.mxu0 0.0
        %297 = vmatpush1.msra.mxu0 0.0
        %298 = vmatprep.subr.mxu0 0.0
        %299 = vmatpush1.msra.mxu0 0.0
        %300 = vmatprep.subr.mxu0 0.0
        %301 = vmatpush1.msra.mxu0 0.0
        %302 = vmatprep.subr.mxu0 0.0
        %303 = vmatpush1.msra.mxu0 0.0
        %304 = vmatprep.subr.mxu0 0.0
        %305 = vmatpush1.msra.mxu0 0.0
        %306 = vmatprep.subr.mxu0 0.0
        %307 = vmatpush1.msra.mxu0 0.0
        %308 = vmatprep.subr.mxu0 0.0
        %309 = vmatpush1.msra.mxu0 0.0
        %310 = vmatprep.mubr.f32.mxu0 0.0
        %311 = vmatmul.mubr.f32.gmra.mrb[0].mxu0 %v199
        %v312 = vpop.f32.mrb[0].mxu0
        %v313 = vadd.f32 0.0, %v312
        %v314 = vpop.f32.mrb[0].mxu0
        %315 = vmatprep.mubr.f32.mxu0 0.0
        %316 = vmatmul.mubr.f32.gmra.mrb[0].mxu0 %v202
        %v317 = vpop.f32.mrb[0].mxu0
        %v318 = vadd.f32 0.0, %v317
        %v319 = vpop.f32.mrb[0].mxu0
        %320 = vmatprep.mubr.f32.mxu0 0.0
        %321 = vmatmul.mubr.f32.gmra.mrb[0].mxu0 %v205
        %v322 = vpop.f32.mrb[0].mxu0
        %v323 = vadd.f32 0.0, %v322
        %v324 = vpop.f32.mrb[0].mxu0
        %325 = vmatprep.mubr.f32.mxu0 0.0
        %326 = vmatmul.mubr.f32.gmra.mrb[0].mxu0 %v208
        %v327 = vpop.f32.mrb[0].mxu0
        %v328 = vadd.f32 0.0, %v327
        %v329 = vpop.f32.mrb[0].mxu0
        %330 = vmatprep.mubr.f32.mxu0 0.0
        %331 = vmatmul.mubr.f32.gmra.mrb[0].mxu0 %v211
        %v332 = vpop.f32.mrb[0].mxu0
        %v333 = vadd.f32 0.0, %v332
        %v334 = vpop.f32.mrb[0].mxu0
        %335 = vmatprep.mubr.f32.mxu0 0.0
        %336 = vmatmul.mubr.f32.gmra.mrb[0].mxu0 %v214
        %v337 = vpop.f32.mrb[0].mxu0
        %v338 = vadd.f32 0.0, %v337
        %v339 = vpop.f32.mrb[0].mxu0
        %340 = vmatprep.mubr.f32.mxu0 0.0
        %341 = vmatmul.mubr.f32.gmra.mrb[0].mxu0 %v217
        %v342 = vpop.f32.mrb[0].mxu0
        %v343 = vadd.f32 0.0, %v342
        %v344 = vpop.f32.mrb[0].mxu0
        %345 = vmatprep.mubr.f32.mxu0 0.0
        %346 = vmatmul.mubr.f32.gmra.mrb[0].mxu0 %v220
        %v347 = vpop.f32.mrb[0].mxu0
        %v348 = vadd.f32 0.0, %v347
        %v349 = vpop.f32.mrb[0].mxu0
        %350 = vmatprep.mubr.f32.mxu0 0.0
        %351 = vmatmul.mubr.f32.gmra.mrb[0].mxu0 %v223
        %v352 = vpop.f32.mrb[0].mxu0
        %v353 = vadd.f32 0.0, %v352
        %v354 = vpop.f32.mrb[0].mxu0
        %355 = vmatprep.mubr.f32.mxu0 0.0
        %356 = vmatmul.mubr.f32.gmra.mrb[0].mxu0 %v226
        %v357 = vpop.f32.mrb[0].mxu0
        %v358 = vadd.f32 0.0, %v357
        %v359 = vpop.f32.mrb[0].mxu0
        %360 = vmatprep.mubr.f32.mxu0 0.0
        %361 = vmatmul.mubr.f32.gmra.mrb[0].mxu0 %v229
        %v362 = vpop.f32.mrb[0].mxu0
        %v363 = vadd.f32 0.0, %v362
        %v364 = vpop.f32.mrb[0].mxu0
        %365 = vmatprep.mubr.f32.mxu0 0.0
        %366 = vmatmul.mubr.f32.gmra.mrb[0].mxu0 %v232
        %v367 = vpop.f32.mrb[0].mxu0
        %v368 = vadd.f32 0.0, %v367
        %v369 = vpop.f32.mrb[0].mxu0
        %370 = vmatprep.mubr.f32.mxu0 0.0
        %371 = vmatmul.mubr.f32.gmra.mrb[0].mxu0 %v235
        %v372 = vpop.f32.mrb[0].mxu0
        %v373 = vadd.f32 0.0, %v372
        %v374 = vpop.f32.mrb[0].mxu0
        %375 = vmatprep.mubr.f32.mxu0 0.0
        %376 = vmatmul.mubr.f32.gmra.mrb[0].mxu0 %v238
        %v377 = vpop.f32.mrb[0].mxu0
        %v378 = vadd.f32 0.0, %v377
        %v379 = vpop.f32.mrb[0].mxu0
        %380 = vmatprep.mubr.f32.mxu0 0.0
        %381 = vmatmul.mubr.f32.gmra.mrb[0].mxu0 %v241
        %v382 = vpop.f32.mrb[0].mxu0
        %v383 = vadd.f32 0.0, %v382
        %v384 = vpop.f32.mrb[0].mxu0
        %385 = vmatprep.mubr.f32.mxu0 0.0
        %386 = vmatmul.mubr.f32.gmra.mrb[0].mxu0 %v244
        %v387 = vpop.f32.mrb[0].mxu0
        %v388 = vadd.f32 0.0, %v387
        %v389 = vpop.f32.mrb[0].mxu0
        %390 = vdwg.mxu0
        %391 = vst [vmem:[%s149] sm:$0xff] %v313
        %392 = vst [vmem:[%s149 + $0x8] sm:$0xff] %v318
        %393 = vst [vmem:[%s149 + $0x10] sm:$0xff] %v323
        %394 = vst [vmem:[%s149 + $0x18] sm:$0xff] %v328
        %395 = vst [vmem:[%s149 + $0x20] sm:$0xff] %v333
        %396 = vst [vmem:[%s149 + $0x28] sm:$0xff] %v338
        %397 = vst [vmem:[%s149 + $0x30] sm:$0xff] %v343
        %398 = vst [vmem:[%s149 + $0x38] sm:$0xff] %v348
        %399 = vst [vmem:[%s149 + $0x40] sm:$0xff] %v353
        %400 = vst [vmem:[%s149 + $0x48] sm:$0xff] %v358
        %401 = vst [vmem:[%s149 + $0x50] sm:$0xff] %v363
        %402 = vst [vmem:[%s149 + $0x58] sm:$0xff] %v368
        %403 = vst [vmem:[%s149 + $0x60] sm:$0xff] %v373
        %404 = vst [vmem:[%s149 + $0x68] sm:$0xff] %v378
        %405 = vst [vmem:[%s149 + $0x70] sm:$0xff] %v383
        %406 = vst [vmem:[%s149 + $0x78] sm:$0xff] %v388
        %s407 = sand.u32 %s71, 1
        %s408 = scalar_lea.sflag [#allocation3], %s407
        %s409 = sand.u32 %s71, 1
        %s410 = smul.addr %s409, 128
        %s411 = scalar_lea.vmem [#allocation2], %s410
        // Predicated region
        $region29: #{tpu_custom_call.1} parent=27 // pred_check
          %p412 = pneg %p81
        $region30: #{tpu_custom_call.1} parent=27 // pred_check_branch
          %414 = sbr.rel (%p412) target = $region32
        $region31: #{tpu_custom_call.1} parent=27 // pred_region
          %s415 = smul.u32 16, %s16
          %s416 = ssub.s32 38, %s415
          %p417 = scmp.lt.s32.totalorder %s416, 16
          %s418 = scalar_select %p417, %s416, 16
          %s419 = smul.u32 128, %s418
          %s421 = ssub.s32 2048, %s419
          %422 = vsyncadd %s408, %s421
          %p423 = scmp.ne.s32.totalorder 0, %s419
          %s424 = smul.addr %s415, 128
          %s425 = scalar_lea.hbm %s2, %s424
          %s426 = smul.u32 8, %s418
          %s427 = sshll.u32 %s411, 4
          %s428 = int_to_ptr.vmem [resolvable:$true] %s427
          %s429 = sshll.u32 %s426, 4
          %433 = dma.vmem_to_hbm [thread:$0]  (%p423), %s428, %s429, %s425, %s408, 128, 128, 8
        $region32: #{tpu_custom_call.1} parent=27 // pred_fallthru
          _
      $region28: #{tpu_custom_call.1} parent=5 // pred_fallthru
        _
      %p434 = scmp.le.s32.totalorder 2, %s11
      // Predicated region
      $region33: #{tpu_custom_call.1} parent=5 // pred_check
        %p435 = pneg %p434
      $region34: #{tpu_custom_call.1} parent=5 // pred_check_branch
        %437 = sbr.rel (%p435) target = $region36
      $region35: #{tpu_custom_call.1} parent=5 // pred_region
        %s438 = ssub.s32 %s11, 2
        // Predicated region
        $region37: #{tpu_custom_call.1} parent=35 // pred_check
          %p439 = pneg %p87
        $region38: #{tpu_custom_call.1} parent=35 // pred_check_branch
          %441 = sbr.rel (%p439) target = $region40
        $region39: #{tpu_custom_call.1} parent=35 // pred_region
          %s442 = sand.u32 %s72, 1
          %s443 = scalar_lea.sflag [#allocation3], %s442
          %s444 = sand.u32 %s72, 1
          %s445 = smul.addr %s444, 128
          %s446 = scalar_lea.vmem [#allocation2], %s445
          %447 = dma.done %s443, 2048
        $region40: #{tpu_custom_call.1} parent=35 // pred_fallthru
          _
      $region36: #{tpu_custom_call.1} parent=5 // pred_fallthru
        _
    $region6: #{tpu_custom_call.1} parent=1 // loop_footer
      %s15 = sadd.s32 1, %s11
    $region7: #{tpu_custom_call.1} parent=1 // loop_footer_branch
      %10 = sbr.rel target = $region3
    $region8: #{tpu_custom_call.1} parent=1 // loop_exit
      _
    %448 = vsyncpa [#allocation3], 1
    %s449 = scalar_lea.sflag [#allocation3], 1
    %450 = vsyncpa %s449, 1

</llo_original>
